<compile_context>
chip_gen: v7x
topology: tpu7x:2x2x1
jax: 0.10.0
libtpu: 0.0.40
codegen_flags: <defaults>
</compile_context>

<pallas_src>
import math

import numpy as np
import jax
import jax.numpy as jnp
from jax.experimental import pallas as pl
from jax.experimental.pallas import tpu as pltpu


def _sinusoidal_kernel(x_ref, expand_ref, freq_ref, phase_ref, out_ref):
    # x_ref:      (TB, G)  packed timesteps (G timesteps per output row)
    # expand_ref: (G, L)   0/1 matrix; repeats each timestep `dim` times
    # freq_ref:   (1, L)   per-output-column frequency
    # phase_ref:  (1, L)   0.0 for sin columns, pi/2 for cos columns
    # out_ref:    (TB, L)
    x_exp = jnp.dot(x_ref[...], expand_ref[...],
                    preferred_element_type=jnp.float32)   # (TB, L)  MXU (otherwise idle)
    emb = x_exp * freq_ref[...] + phase_ref[...]          # (TB, L)  VPU
    out_ref[...] = jnp.sin(emb).astype(out_ref.dtype)     # single transcendental


def _round_up(v: int, m: int) -> int:
    return -(-v // m) * m


def sinusoidal_pos_emb(x: jax.Array, dim: int, *,
                       block_rows: int = 4096,
                       out_dtype=jnp.float32) -> jax.Array:
    """Pallas equivalent of SinusoidalPosEmb(dim)(x): (B,) -> (B, dim)."""
    assert x.ndim == 1, "x must be a 1-D vector of timesteps"
    assert dim % 2 == 0, "dim must be even (sin/cos halves)"
    assert dim >= 4, "dim must be >= 4 (dim == 2 divides by zero in the reference)"
    assert block_rows % 8 == 0

    B = int(x.shape[0])
    half = dim // 2

    # Lane packing factor: L = G*dim is always a dense multiple of 128 lanes.
    G = 128 // math.gcd(dim, 128)
    L = G * dim

    # -------- host-side constants (computed once, passed as small VMEM inputs)
    k = np.arange(half, dtype=np.float64)
    f = np.exp(-k * (math.log(10000.0) / (half - 1))).astype(np.float32)         # (half,)
    col = np.arange(L)
    j = col % dim
    freq_row = f[np.where(j < half, j, j - half)][None, :].astype(np.float32)    # (1, L)
    phase_row = np.where(j < half, 0.0, np.pi / 2.0).astype(np.float32)[None, :]  # (1, L)
    expand = (np.arange(G)[:, None] == (col // dim)[None, :]).astype(np.float32)  # (G, L)

    # -------- row tiling over the packed (R, G) timestep array
    R = -(-B // G)                                   # ceil(B / G) packed rows

    # VMEM budget: output block <= ~4 MiB per buffer; the (TB, G) timestep
    # block lane-pads to 128 lanes (TB*128*4 bytes), which this cap also keeps
    # comfortably inside the 32 MiB scoped default on every generation.
    tb_cap = max(8, (4 * 1024 * 1024 // (L * 4)) // 8 * 8)

    if R <= 8:
        TB = R                                       # single tiny full-extent block
    else:
        # >= 2 grid blocks so v7x's two TensorCores both get work.
        TB = min(block_rows, tb_cap, _round_up(-(-R // 2), 8))
    Rp = _round_up(R, TB)
    num_blocks = Rp // TB
    Bp = Rp * G

    xf = x.astype(jnp.float32)
    if Bp != B:
        xf = jnp.pad(xf, (0, Bp - B))                # padded rows sliced off below
    x2 = xf.reshape(Rp, G)

    out = pl.pallas_call(
        _sinusoidal_kernel,
        out_shape=jax.ShapeDtypeStruct((Rp, L), out_dtype),
        grid=(num_blocks,),
        in_specs=[
            pl.BlockSpec((TB, G), lambda i: (i, 0)),   # timesteps: tiled over rows
            pl.BlockSpec((G, L), lambda i: (0, 0)),    # expansion matrix: constant
            pl.BlockSpec((1, L), lambda i: (0, 0)),    # frequencies: constant
            pl.BlockSpec((1, L), lambda i: (0, 0)),    # phases: constant
        ],
        out_specs=pl.BlockSpec((TB, L), lambda i: (i, 0)),
        compiler_params=pltpu.CompilerParams(
            dimension_semantics=("parallel",),         # shard row-grid across TCs
        ),
    )(x2, jnp.asarray(expand), jnp.asarray(freq_row), jnp.asarray(phase_row))

    # Free (contiguous) reshape back to (B, dim), drop padding rows.
    return out.reshape(Rp * G, dim)[:B]


def _reference(x: jax.Array, dim: int) -> jax.Array:
    half_dim = dim // 2
    emb = math.log(10000.0) / (half_dim - 1)
    emb = jnp.exp(jnp.arange(half_dim, dtype=jnp.float32) * -emb)
    emb = x.astype(jnp.float32)[:, None] * emb[None, :]
    return jnp.concatenate([jnp.sin(emb), jnp.cos(emb)], axis=-1)


if __name__ == "__main__":
    key = jax.random.PRNGKey(0)

    # Primary small case matching the module defaults.
    B, DIM = 8, 32
    x = jax.random.uniform(key, (B,), dtype=jnp.float32, minval=0.0, maxval=1000.0)
    out = jax.block_until_ready(sinusoidal_pos_emb(x, DIM))
    ref = _reference(x, DIM)
    assert out.shape == (B, DIM), out.shape
    assert out.dtype == jnp.float32, out.dtype
    assert jnp.allclose(out, ref, atol=5e-4, rtol=1e-4), "mismatch vs reference"

    # Extra coverage: padding, multi-block grid, gcd packing (dim=48), G=1 path.
    for (b2, d2) in [(5000, 32), (17, 64), (300, 128), (64, 48)]:
        k2 = jax.random.fold_in(key, b2 * 1000 + d2)
        x2 = jax.random.uniform(k2, (b2,), dtype=jnp.float32, minval=0.0, maxval=1000.0)
        o2 = jax.block_until_ready(sinusoidal_pos_emb(x2, d2))
        r2 = _reference(x2, d2)
        assert o2.shape == (b2, d2), (o2.shape, b2, d2)
        assert jnp.allclose(o2, r2, atol=5e-4, rtol=1e-4), ("mismatch", b2, d2)

    # bf16 output path (math stays f32, cast only at the store).
    o_bf16 = jax.block_until_ready(sinusoidal_pos_emb(x, DIM, out_dtype=jnp.bfloat16))
    assert o_bf16.dtype == jnp.bfloat16
    assert jnp.allclose(o_bf16.astype(jnp.float32), ref, atol=1e-2, rtol=1e-2)

    print("KERNEL_OK")
</pallas_src>

<mosaic_0001>
module attributes {stable_mosaic.version = 11 : i64} {
  func.func @_sinusoidal_kernel(%arg0: i32, %arg1: memref<2x4xf32, #tpu.memory_space<vmem>>, %arg2: memref<4x128xf32, #tpu.memory_space<vmem>>, %arg3: memref<1x128xf32, #tpu.memory_space<vmem>>, %arg4: memref<1x128xf32, #tpu.memory_space<vmem>>, %arg5: memref<2x128xf32, #tpu.memory_space<vmem>>) attributes {dimension_semantics = [#tpu.dimension_semantics<parallel>], iteration_bounds = array<i64: 1>, scalar_prefetch = 0 : i64, scratch_operands = 0 : i64, tpu.core_type = #tpu.core_type<tc>, window_params = [{transform_indices = @transform_0, window_bounds = array<i64: 2, 4>}, {pipeline_mode = #tpu.pipeline_mode<synchronous>, transform_indices = @transform_1, window_bounds = array<i64: 4, 128>}, {pipeline_mode = #tpu.pipeline_mode<synchronous>, transform_indices = @transform_2, window_bounds = array<i64: 1, 128>}, {pipeline_mode = #tpu.pipeline_mode<synchronous>, transform_indices = @transform_3, window_bounds = array<i64: 1, 128>}, {transform_indices = @transform_4, window_bounds = array<i64: 2, 128>}]} {
    %c0 = arith.constant 0 : index
    %c0_0 = arith.constant 0 : index
    %0 = vector.load %arg1[%c0, %c0_0] : memref<2x4xf32, #tpu.memory_space<vmem>>, vector<2x4xf32>
    %c0_1 = arith.constant 0 : index
    %c0_2 = arith.constant 0 : index
    %1 = vector.load %arg2[%c0_1, %c0_2] : memref<4x128xf32, #tpu.memory_space<vmem>>, vector<4x128xf32>
    %cst = arith.constant dense<0.000000e+00> : vector<2x128xf32>
    %2 = tpu.matmul %0, %1, %cst {dimension_numbers = #tpu.dot_dimension_numbers<[1], [0], [0], [1], [0, 0, 1, 1], [], []>} : vector<2x4xf32>, vector<4x128xf32>, vector<2x128xf32> -> vector<2x128xf32>
    %c0_3 = arith.constant 0 : index
    %c0_4 = arith.constant 0 : index
    %3 = vector.load %arg3[%c0_3, %c0_4] : memref<1x128xf32, #tpu.memory_space<vmem>>, vector<1x128xf32>
    %4 = vector.broadcast %3 : vector<1x128xf32> to vector<2x128xf32>
    %5 = arith.mulf %2, %4 : vector<2x128xf32>
    %c0_5 = arith.constant 0 : index
    %c0_6 = arith.constant 0 : index
    %6 = vector.load %arg4[%c0_5, %c0_6] : memref<1x128xf32, #tpu.memory_space<vmem>>, vector<1x128xf32>
    %7 = vector.broadcast %6 : vector<1x128xf32> to vector<2x128xf32>
    %8 = arith.addf %5, %7 : vector<2x128xf32>
    %9 = math.sin %8 : vector<2x128xf32>
    %c0_7 = arith.constant 0 : index
    %c0_8 = arith.constant 0 : index
    %10 = vector.load %arg5[%c0_7, %c0_8] : memref<2x128xf32, #tpu.memory_space<vmem>>, vector<2x128xf32>
    tpu.vector_store %arg5[%c0_7, %c0_8], %9 {strides = array<i32>} : memref<2x128xf32, #tpu.memory_space<vmem>>, vector<2x128xf32>,
    return
  }
  func.func @transform_0(%arg0: i32) -> (i32, i32) {
    %c0_i32 = arith.constant 0 : i32
    %c0_i32_0 = arith.constant 0 : i32
    return %arg0, %c0_i32 : i32, i32
  }
  func.func @transform_1(%arg0: i32) -> (i32, i32) {
    %c0_i32 = arith.constant 0 : i32
    %c0_i32_0 = arith.constant 0 : i32
    %c0_i32_1 = arith.constant 0 : i32
    return %c0_i32, %c0_i32_0 : i32, i32
  }
  func.func @transform_2(%arg0: i32) -> (i32, i32) {
    %c0_i32 = arith.constant 0 : i32
    %c0_i32_0 = arith.constant 0 : i32
    %c0_i32_1 = arith.constant 0 : i32
    return %c0_i32, %c0_i32_0 : i32, i32
  }
  func.func @transform_3(%arg0: i32) -> (i32, i32) {
    %c0_i32 = arith.constant 0 : i32
    %c0_i32_0 = arith.constant 0 : i32
    %c0_i32_1 = arith.constant 0 : i32
    return %c0_i32, %c0_i32_0 : i32, i32
  }
  func.func @transform_4(%arg0: i32) -> (i32, i32) {
    %c0_i32 = arith.constant 0 : i32
    %c0_i32_0 = arith.constant 0 : i32
    return %arg0, %c0_i32 : i32, i32
  }
}

</mosaic_0001>

<llo_original>
// kernel: tpu_custom_call.1
$region0: #{tpu_custom_call.1}
  #allocation0 [shape = 'u32[]', space=smem, size = 0x4, offset = 0x4, fixed_abs, tag = 'smem constant byte address 0x4 - core index']
  #allocation1 [shape = 'u32[144,128]{1,0:T(1,128)}', space=vmem, size = 0x12000, scoped, tag = 'internal scratch']
  %s0 = inlined_call_operand.hbm [shape: f32[2,4], index: 0, kind: input, shape index: {}]
  %s1 = inlined_call_operand.hbm [shape: f32[4,128], index: 1, kind: input, shape index: {}]
  %s2 = inlined_call_operand.vmem [shape: f32[1,128], index: 2, kind: input, shape index: {}]
  %s3 = inlined_call_operand.vmem [shape: f32[1,128], index: 3, kind: input, shape index: {}]
  %s4 = inlined_call_operand.hbm [shape: f32[2,128], index: 4, kind: output, shape index: {}]
  %s5 = sld [smem:[#allocation0]]
  $region34: #{tpu_custom_call.1} parent=0
    _
  %s7 = ssub.s32 1, %s5
  %s8 = scalar_select 0, %s7, %s5
  $region1: #{tpu_custom_call.1} parent=0
    #allocation2 [shape = 'u8[1024]{0}', space=vmem, size = 0x400, scoped, tag = 'input window, operand 0, single buffered']
    #allocation3 [shape = 's32[1]{0}', space=sflag, size = 0x4, scoped, tag = 'scoped memory for tpu_custom_call.1']
    #allocation4 [shape = 's32[1]{0}', space=sflag, size = 0x4, scoped, tag = 'scoped memory for tpu_custom_call.1']
    #allocation5 [shape = 'u8[2048]{0}', space=vmem, size = 0x800, scoped, tag = 'input window, operand 1, single buffered']
    #allocation6 [shape = 's32[1]{0}', space=sflag, size = 0x4, scoped, tag = 'scoped memory for tpu_custom_call.1']
    #allocation7 [shape = 'u8[1024]{0}', space=vmem, size = 0x400, scoped, tag = 'output window, operand 0, single buffered']
    %9 = vsyncpa [#allocation3], 0
    %10 = vsyncpa [#allocation6], 0
    %11 = vsyncpa [#allocation4], 0
    // Predicated region
    $region2: #{tpu_custom_call.1} parent=1 // pred_check
      _
    $region3: #{tpu_custom_call.1} parent=1 // pred_check_branch
      %13 = sbr.rel (0) target = $region5
    $region4: #{tpu_custom_call.1} parent=1 // pred_region
      %s15 = ssub.s32 32, 32
      %16 = vsyncadd [#allocation3], %s15
      %s18 = sshll.u32 [#allocation2], 4
      %s19 = int_to_ptr.vmem [resolvable:$true] %s18
      %21 = dma.hbm_to_vmem [thread:$0]  %s0, 32, %s19, [#allocation3]
    $region5: #{tpu_custom_call.1} parent=1 // pred_fallthru
      _
    // Predicated region
    $region6: #{tpu_custom_call.1} parent=1 // pred_check
      _
    $region7: #{tpu_custom_call.1} parent=1 // pred_check_branch
      %23 = sbr.rel (0) target = $region9
    $region8: #{tpu_custom_call.1} parent=1 // pred_region
      %s25 = ssub.s32 64, 64
      %26 = vsyncadd [#allocation6], %s25
      %s28 = sshll.u32 [#allocation5], 4
      %s29 = int_to_ptr.vmem [resolvable:$true] %s28
      %31 = dma.hbm_to_vmem [thread:$0]  %s1, 64, %s29, [#allocation6]
    $region9: #{tpu_custom_call.1} parent=1 // pred_fallthru
      _
    // Predicated region
    $region10: #{tpu_custom_call.1} parent=1 // pred_check
      _
    $region11: #{tpu_custom_call.1} parent=1 // pred_check_branch
      %33 = sbr.rel (0) target = $region13
    $region12: #{tpu_custom_call.1} parent=1 // pred_region
      _
    $region13: #{tpu_custom_call.1} parent=1 // pred_fallthru
      _
    // Predicated region
    $region14: #{tpu_custom_call.1} parent=1 // pred_check
      _
    $region15: #{tpu_custom_call.1} parent=1 // pred_check_branch
      %35 = sbr.rel (0) target = $region17
    $region16: #{tpu_custom_call.1} parent=1 // pred_region
      _
    $region17: #{tpu_custom_call.1} parent=1 // pred_fallthru
      _
    // Predicated region
    $region18: #{tpu_custom_call.1} parent=1 // pred_check
      _
    $region19: #{tpu_custom_call.1} parent=1 // pred_check_branch
      %37 = sbr.rel (0) target = $region21
    $region20: #{tpu_custom_call.1} parent=1 // pred_region
      %38 = dma.done [#allocation3], 32
    $region21: #{tpu_custom_call.1} parent=1 // pred_fallthru
      _
    // Predicated region
    $region22: #{tpu_custom_call.1} parent=1 // pred_check
      _
    $region23: #{tpu_custom_call.1} parent=1 // pred_check_branch
      %40 = sbr.rel (0) target = $region25
    $region24: #{tpu_custom_call.1} parent=1 // pred_region
      %41 = dma.done [#allocation6], 64
    $region25: #{tpu_custom_call.1} parent=1 // pred_fallthru
      _
    %v42 = vld [vmem:[#allocation2] sm:$0x3]
    %v43 = vld [vmem:[#allocation5] sm:$0xf]
    %vm44 = vcmask 31744
    %v46 = vsel %vm44, %v42, 0
    %vm48 = vcmask 1043456
    %v50 = vsel %vm48, %v43, 0
    %52 = vmatprep.subr.mxu0 0.0
    %53 = vmatpush1.msra.mxu0 %v50
    %54 = vmatprep.subr.mxu0 0.0
    %55 = vmatpush1.msra.mxu0 0.0
    %56 = vmatprep.subr.mxu0 0.0
    %57 = vmatpush1.msra.mxu0 0.0
    %58 = vmatprep.subr.mxu0 0.0
    %59 = vmatpush1.msra.mxu0 0.0
    %60 = vmatprep.subr.mxu0 0.0
    %61 = vmatpush1.msra.mxu0 0.0
    %62 = vmatprep.subr.mxu0 0.0
    %63 = vmatpush1.msra.mxu0 0.0
    %64 = vmatprep.subr.mxu0 0.0
    %65 = vmatpush1.msra.mxu0 0.0
    %66 = vmatprep.subr.mxu0 0.0
    %67 = vmatpush1.msra.mxu0 0.0
    %68 = vmatprep.subr.mxu0 0.0
    %69 = vmatpush1.msra.mxu0 0.0
    %70 = vmatprep.subr.mxu0 0.0
    %71 = vmatpush1.msra.mxu0 0.0
    %72 = vmatprep.subr.mxu0 0.0
    %73 = vmatpush1.msra.mxu0 0.0
    %74 = vmatprep.subr.mxu0 0.0
    %75 = vmatpush1.msra.mxu0 0.0
    %76 = vmatprep.subr.mxu0 0.0
    %77 = vmatpush1.msra.mxu0 0.0
    %78 = vmatprep.subr.mxu0 0.0
    %79 = vmatpush1.msra.mxu0 0.0
    %80 = vmatprep.subr.mxu0 0.0
    %81 = vmatpush1.msra.mxu0 0.0
    %82 = vmatprep.subr.mxu0 0.0
    %83 = vmatpush1.msra.mxu0 0.0
    %84 = vmatprep.subr.mxu0 0.0
    %85 = vmatpush1.msra.mxu0 0.0
    %86 = vmatprep.subr.mxu0 0.0
    %87 = vmatpush1.msra.mxu0 0.0
    %88 = vmatprep.subr.mxu0 0.0
    %89 = vmatpush1.msra.mxu0 0.0
    %90 = vmatprep.subr.mxu0 0.0
    %91 = vmatpush1.msra.mxu0 0.0
    %92 = vmatprep.subr.mxu0 0.0
    %93 = vmatpush1.msra.mxu0 0.0
    %94 = vmatprep.subr.mxu0 0.0
    %95 = vmatpush1.msra.mxu0 0.0
    %96 = vmatprep.subr.mxu0 0.0
    %97 = vmatpush1.msra.mxu0 0.0
    %98 = vmatprep.subr.mxu0 0.0
    %99 = vmatpush1.msra.mxu0 0.0
    %100 = vmatprep.subr.mxu0 0.0
    %101 = vmatpush1.msra.mxu0 0.0
    %102 = vmatprep.subr.mxu0 0.0
    %103 = vmatpush1.msra.mxu0 0.0
    %104 = vmatprep.subr.mxu0 0.0
    %105 = vmatpush1.msra.mxu0 0.0
    %106 = vmatprep.subr.mxu0 0.0
    %107 = vmatpush1.msra.mxu0 0.0
    %108 = vmatprep.subr.mxu0 0.0
    %109 = vmatpush1.msra.mxu0 0.0
    %110 = vmatprep.subr.mxu0 0.0
    %111 = vmatpush1.msra.mxu0 0.0
    %112 = vmatprep.subr.mxu0 0.0
    %113 = vmatpush1.msra.mxu0 0.0
    %114 = vmatprep.subr.mxu0 0.0
    %115 = vmatpush1.msra.mxu0 0.0
    %116 = vmatprep.mubr.f32.mxu0 0.0
    %117 = vmatmul.mubr.f32.gmra.mrb[0].mxu0 %v46
    %v118 = vpop.f32.mrb[0].mxu0
    %v119 = vadd.f32 0.0, %v118
    %v120 = vpop.f32.mrb[0].mxu0
    %121 = vdwg.mxu0
    %v122 = vld [vmem:[%s2] sm:$0x1]
    %v124 = vlaneseq
    %v125 = vshrl.u32 %v124, 7
    %v126 = vsub.s32 0, %v125
    %v127 = vrot.slane %v122, %v126
    %v129 = vmul.f32 %v119, %v127
    %v130 = vld [vmem:[%s3] sm:$0x1]
    %v132 = vlaneseq
    %v133 = vshrl.u32 %v132, 7
    %v134 = vsub.s32 0, %v133
    %v135 = vrot.slane %v130, %v134
    %v137 = vadd.f32 %v129, %v135
    %v138 = vand.u32 2147483647, %v137
    %vm139 = vcmp.le.f32.partialorder %v138, 0.7853982
    %vm140 = vcmp.lt.s32.totalorder %v137, 0
    %v141 = vand.u32 %v137, 2139095040
    %v142 = vshrl.u32 %v141, 23
    %v143 = vsub.s32 %v142, 127
    %v144 = vand.u32 2147483647, %v137
    %v145 = vand.u32 %v144, 8388607
    %v146 = vor.u32 %v145, 8388608
    %v147 = vsub.s32 0, %v146
    %v148 = vadd.s32 %v143, 1
    %vm149 = vcmp.gt.s32.totalorder %v148, 0
    %v150 = vsel %vm149, %v148, 0
    %v151 = vshrl.u32 %v150, 5
    %v152 = vand.u32 %v150, 31
    %v153 = vsub.s32 32, %v152
    %v154 = vshrl.u32 683565275, %v153
    %v155 = vshll.u32 683565275, %v152
    %v156 = vshrl.u32 2475754826, %v153
    %v157 = vor.u32 %v155, %v156
    %v158 = vshll.u32 2475754826, %v152
    %v159 = vshrl.u32 2131351028, %v153
    %v160 = vor.u32 %v158, %v159
    %v161 = vshll.u32 2131351028, %v152
    %v162 = vshrl.u32 2102212464, %v153
    %v163 = vor.u32 %v161, %v162
    %v164 = vshll.u32 2102212464, %v152
    %v165 = vshrl.u32 920167782, %v153
    %v166 = vor.u32 %v164, %v165
    %v167 = vshll.u32 920167782, %v152
    %v168 = vshrl.u32 1326507024, %v153
    %v169 = vor.u32 %v167, %v168
    %vm170 = vcmp.lt.s32.totalorder %v151, 1
    %vm171 = vcmp.lt.s32.totalorder %v151, 2
    %vm172 = vcmp.lt.s32.totalorder %v151, 3
    %vm173 = vcmp.lt.s32.totalorder %v151, 4
    %v174 = vsel %vm170, %v154, %v157
    %v175 = vsel %vm173, %v163, 2102212464
    %v176 = vsel %vm172, %v160, %v175
    %v177 = vsel %vm171, %v174, %v176
    %v178 = vsel %vm170, %v157, %v160
    %v179 = vsel %vm173, %v166, 920167782
    %v180 = vsel %vm172, %v163, %v179
    %v181 = vsel %vm171, %v178, %v180
    %v182 = vsel %vm170, %v160, %v163
    %v183 = vsel %vm173, %v169, 1326507024
    %v184 = vsel %vm172, %v166, %v183
    %v185 = vsel %vm171, %v182, %v184
    %v186 = vshll.u32 %v146, 8
    %v187 = vmul.u32.u64.compose %v186, %v185
    %v188 = vextract.low.u32 %v187
    %v189 = vextract.high.u32 %v187
    %v190 = vmul.u32.u64.compose %v186, %v181
    %v191 = vextract.low.u32 %v190
    %v192 = vextract.high.u32 %v190
    %v193 = vmul.u32 %v186, %v177
    %v194 = vadd.s32 %v189, %v191
    %vm195 = vc.u32 %v189, %v191
    %v196 = vadd.s32 %v192, 1
    %v197 = vsel %vm195, %v196, %v192
    %v198 = vadd.s32 %v193, %v197
    %v199 = vadd.s32 %v198, 536870912
    %v200 = vshrl.u32 %v199, 30
    %v201 = vshll.u32 %v200, 30
    %v202 = vsub.s32 %v198, %v201
    %vm203 = vcmp.lt.s32.totalorder %v202, 0
    %v204 = vsub.s32 0, %v202
    %v205 = vsel %vm203, %v204, %v202
    %v206 = vclz %v205
    %v207 = vsub.s32 %v206, 2
    %vm208 = vcmp.gt.s32.totalorder 0, %v207
    %v209 = vsel %vm208, 0, %v207
    %v210 = vsub.s32 32, %v209
    %v211 = vshll.u32 %v202, %v209
    %v212 = vshrl.u32 %v194, %v210
    %v213 = vor.u32 %v211, %v212
    %v214 = vsub.s32 4294967266, %v209
    %v215 = vadd.s32 %v214, 127
    %v216 = vshll.u32 %v215, 23
    %v217 = vor.u32 4788187, %v216
    %v218 = vand.u32 2147483647, %v217
    %v220 = vcvt.s32.f32 %v213
    %v221 = vmul.f32 %v220, %v218
    %v222 = vxor.u32 %v221, 2147483648
    %v223 = vsel %vm140, %v222, %v221
    %v224 = vsub.s32 4, %v200
    %v225 = vsel %vm140, %v224, %v200
    %v226 = vsel %vm139, %v137, %v223
    %v227 = vsel %vm139, 0, %v225
    %v228 = vcosq.f32.pop %v226
    %v229 = vsinq.f32.pop %v226
    %vm230 = vweird.f32 %v137
    %v231 = vadd.s32 %v227, 3
    %v232 = vand.u32 %v231, 3
    %vm233 = vcmp.lt.s32.totalorder %v232, 2
    %vm234 = vcmp.eq.s32.totalorder %v232, 0
    %v235 = vxor.u32 %v229, 2147483648
    %v236 = vsel %vm234, %v228, %v235
    %vm237 = vcmp.eq.s32.totalorder %v232, 2
    %v238 = vxor.u32 %v228, 2147483648
    %v239 = vsel %vm237, %v238, %v229
    %v240 = vsel %vm233, %v236, %v239
    %v241 = vsel %vm230, nan, %v240
    %242 = vst [vmem:[#allocation7] sm:$0x3] %v241
    // Predicated region
    $region26: #{tpu_custom_call.1} parent=1 // pred_check
      _
    $region27: #{tpu_custom_call.1} parent=1 // pred_check_branch
      %244 = sbr.rel (0) target = $region29
    $region28: #{tpu_custom_call.1} parent=1 // pred_region
      %s246 = ssub.s32 32, 32
      %247 = vsyncadd [#allocation4], %s246
      %s249 = sshll.u32 [#allocation7], 4
      %s250 = int_to_ptr.vmem [resolvable:$true] %s249
      %252 = dma.vmem_to_hbm [thread:$0]  %s250, 32, %s4, [#allocation4]
    $region29: #{tpu_custom_call.1} parent=1 // pred_fallthru
      _
    // Predicated region
    $region30: #{tpu_custom_call.1} parent=1 // pred_check
      _
    $region31: #{tpu_custom_call.1} parent=1 // pred_check_branch
      %254 = sbr.rel (0) target = $region33
    $region32: #{tpu_custom_call.1} parent=1 // pred_region
      %255 = dma.done [#allocation4], 32
    $region33: #{tpu_custom_call.1} parent=1 // pred_fallthru
      _
    %256 = vsyncpa [#allocation3], 1
    %257 = vsyncpa [#allocation6], 1
    %258 = vsyncpa [#allocation4], 1

</llo_original>
